<compile_context>
chip_gen: v6e
topology: v6e:2x2x1
jax: 0.10.0
libtpu: 0.0.40
codegen_flags: <defaults>
</compile_context>

<pallas_src>
import functools
import numpy as np
import jax
import jax.numpy as jnp
from jax import lax
from jax.experimental import pallas as pl
from jax.experimental.pallas import tpu as pltpu

EPS = 1e-5


# ----------------------------- Pallas kernel ------------------------------- #
def _basic_blocks_kernel(NB, H,
                         x_ref, m0_ref, m1_ref, m2_ref, aux_ref,
                         o_ref):
    # x_ref : (NB*H, W*Cin)  bf16 activation slab for NB images
    # m0_ref: (W*Cin, Lc)    bf16 block-diagonal 1x1-conv matrix
    # m1/m2 : (3*Lc, Lc)     bf16 per-dy shift-and-mix matrices stacked on K
    # aux   : (8, Lc)        f32  rows: 0=b0, 1=s1, 2=t1, 3=s2, 4=t2
    M = x_ref.shape[0]                     # NB * H
    Lc = m0_ref.shape[1]

    aux = aux_ref[...]                     # single (8, Lc) load
    b0 = aux[0:1, :]
    s1 = aux[1:2, :]
    t1 = aux[2:3, :]
    s2 = aux[3:4, :]
    t2 = aux[4:5, :]

    x = x_ref[...]                                                 # (M, W*Cin) bf16

    # 1x1 conv (residual branch): bf16 matmul, f32 accumulate, + bias.
    x1 = jnp.dot(x, m0_ref[...],
                 preferred_element_type=jnp.float32) + b0          # (M, Lc) f32
    x1_bf = x1.astype(jnp.bfloat16)                                # taps built in bf16

    zero_row = jnp.zeros((1, Lc), jnp.bfloat16)
    if NB > 1:
        # per-image boundary masks as an (M, 1) column (broadcast multiply);
        # rows wrap across images after the vertical shift.
        row = lax.broadcasted_iota(jnp.int32, (M, 1), 0) % H
        top_keep = (row != 0).astype(jnp.bfloat16)                 # (M, 1)
        bot_keep = (row != H - 1).astype(jnp.bfloat16)
    else:
        top_keep = bot_keep = None

    def conv3x3_bn_relu(act_bf, m_ref, s, t):
        # Vertical taps built in registers (bf16): row h of `up` holds
        # act[h-1], row h of `dn` holds act[h+1]; zero at image boundaries.
        up = jnp.concatenate([zero_row, act_bf[:-1, :]], axis=0)   # dy = 0
        dn = jnp.concatenate([act_bf[1:, :], zero_row], axis=0)    # dy = 2
        if top_keep is not None:
            up = up * top_keep
            dn = dn * bot_keep
        # Three accumulating K=Lc dots against static slices of the stacked
        # weight — no (M, 3*Lc) concat/astype slab is materialized.
        acc = jnp.dot(up, m_ref[0:Lc, :],
                      preferred_element_type=jnp.float32)
        acc += jnp.dot(act_bf, m_ref[Lc:2 * Lc, :],
                       preferred_element_type=jnp.float32)
        acc += jnp.dot(dn, m_ref[2 * Lc:3 * Lc, :],
                       preferred_element_type=jnp.float32)         # (M, Lc) f32
        # fused (bias + BatchNorm) scale/shift, then ReLU (all f32)
        return jnp.maximum(acc * s + t, 0.0)

    h1 = conv3x3_bn_relu(x1_bf, m1_ref, s1, t1)                    # f32
    h2 = conv3x3_bn_relu(h1.astype(jnp.bfloat16), m2_ref, s2, t2)  # f32
    o_ref[...] = h2 + x1


# ----------------- one-time host-side weight preprocessing ------------------ #
def prepare_basic_blocks(p, W):
    """Build all kernel weight operands ONCE (numpy, host side).

    Returns a dict of device arrays to be reused across every forward call.
    """
    w0 = np.asarray(p["w0"], np.float32)                  # (Cout, Cin, 1, 1)
    Cout, Cin = w0.shape[0], w0.shape[1]
    Lc = W * Cout

    # 1x1 conv -> block-diagonal (W*Cin, W*Cout)
    m0 = np.kron(np.eye(W, dtype=np.float32), w0[:, :, 0, 0].T)

    def conv3_stacked(K):
        # K: (Cout, C, 3, 3) OIHW -> (3*W*C, W*Cout); dy taps stacked along K,
        # each M_dy sums the dx shifts (zero horizontal padding built in).
        K = np.asarray(K, np.float32)
        C = K.shape[1]
        mats = []
        for dy in range(3):
            m = np.zeros((W * C, W * Cout), np.float32)
            for dx in range(3):
                S = np.eye(W, k=1 - dx, dtype=np.float32)
                m += np.kron(S, K[:, :, dy, dx].T)
            mats.append(m)
        return np.concatenate(mats, axis=0)

    m1 = conv3_stacked(p["w1"])
    m2 = conv3_stacked(p["w2"])

    def bn_fold(b, gamma, beta, mean, var):
        b, gamma, beta = np.asarray(b), np.asarray(gamma), np.asarray(beta)
        mean, var = np.asarray(mean), np.asarray(var)
        scale = gamma / np.sqrt(var + EPS)
        shift = scale * (b - mean) + beta
        return (np.tile(scale, W).astype(np.float32),
                np.tile(shift, W).astype(np.float32))

    s1, t1 = bn_fold(p["b1"], p["gamma1"], p["beta1"], p["mean1"], p["var1"])
    s2, t2 = bn_fold(p["b2"], p["gamma2"], p["beta2"], p["mean2"], p["var2"])

    aux = np.zeros((8, Lc), np.float32)
    aux[0] = np.tile(np.asarray(p["b0"], np.float32), W)
    aux[1], aux[2] = s1, t1
    aux[3], aux[4] = s2, t2

    return dict(m0=jnp.asarray(m0, jnp.bfloat16),
                m1=jnp.asarray(m1, jnp.bfloat16),
                m2=jnp.asarray(m2, jnp.bfloat16),
                aux=jnp.asarray(aux),
                Cin=Cin, Cout=Cout, W=W)


def _default_nb(N):
    # Single grid step on single-TensorCore chips (v5e/v6e): grid steps are a
    # serial loop there.  Exactly 2 parallel steps on dual-TC v7x.
    try:
        kind = jax.devices()[0].device_kind.lower()
    except Exception:
        kind = ""
    dual_tc = ("v7" in kind) or ("7x" in kind)
    if dual_tc and N >= 2 and N % 2 == 0:
        return N // 2
    return N


# -------------------------------- wrapper ----------------------------------- #
@functools.partial(jax.jit, static_argnums=(5,))
def _forward(x_nchw, m0, m1, m2, aux, nb):
    N, Cin, H, W = x_nchw.shape
    Li, Lc = m0.shape
    Cout = Lc // W
    assert Li == W * Cin and N % nb == 0
    grid = (N // nb,)

    # NCHW -> (N*H, W*Cin), channel fastest along lanes; bf16 for the MXU.
    x_k = (jnp.transpose(x_nchw, (0, 2, 3, 1))
           .reshape(N * H, Li).astype(jnp.bfloat16))

    kernel = functools.partial(_basic_blocks_kernel, nb, H)

    m_total = N * H
    flops = 2 * m_total * Lc * (Li + 6 * Lc) + 8 * m_total * Lc
    bytes_accessed = (m_total * Li * 2 + m_total * Lc * 4 +
                      Li * Lc * 2 + 2 * (3 * Lc * Lc) * 2 + 8 * Lc * 4)

    out = pl.pallas_call(
        kernel,
        out_shape=jax.ShapeDtypeStruct((N * H, Lc), jnp.float32),
        grid=grid,
        in_specs=[
            pl.BlockSpec((nb * H, Li), lambda n: (n, 0)),     # activations
            pl.BlockSpec((Li, Lc), lambda n: (0, 0)),         # m0 (1x1)
            pl.BlockSpec((3 * Lc, Lc), lambda n: (0, 0)),     # m1 (dy-stacked)
            pl.BlockSpec((3 * Lc, Lc), lambda n: (0, 0)),     # m2 (dy-stacked)
            pl.BlockSpec((8, Lc), lambda n: (0, 0)),          # packed bias/BN rows
        ],
        out_specs=pl.BlockSpec((nb * H, Lc), lambda n: (n, 0)),
        compiler_params=pltpu.CompilerParams(
            dimension_semantics=("parallel",),
            vmem_limit_bytes=32 * 1024 * 1024),
        cost_estimate=pl.CostEstimate(flops=flops, transcendentals=0,
                                      bytes_accessed=bytes_accessed),
    )(x_k, m0, m1, m2, aux)

    # back to NCHW (for stacked blocks, keep the lane-dense layout instead)
    return jnp.transpose(out.reshape(N, H, W, Cout), (0, 3, 1, 2))


def basic_blocks_pallas(x_nchw, prep, nb=None):
    if nb is None:
        nb = _default_nb(x_nchw.shape[0])
    return _forward(x_nchw, prep["m0"], prep["m1"], prep["m2"], prep["aux"], nb)


# ------------------------- plain-JAX reference ------------------------------ #
def _ref_forward(x, p):
    dn = ("NCHW", "OIHW", "NCHW")

    def conv(z, K, b, pad):
        y = lax.conv_general_dilated(z, K, (1, 1), ((pad, pad), (pad, pad)),
                                     dimension_numbers=dn)
        return y + b[None, :, None, None]

    def bn_relu(z, gamma, beta, mean, var):
        z = (z - mean[None, :, None, None]) / jnp.sqrt(var[None, :, None, None] + EPS)
        z = z * gamma[None, :, None, None] + beta[None, :, None, None]
        return jnp.maximum(z, 0.0)

    x0 = conv(x, p["w0"], p["b0"], 0)
    c1 = bn_relu(conv(x0, p["w1"], p["b1"], 1),
                 p["gamma1"], p["beta1"], p["mean1"], p["var1"])
    c2 = bn_relu(conv(c1, p["w2"], p["b2"], 1),
                 p["gamma2"], p["beta2"], p["mean2"], p["var2"])
    return c2 + x0


# ----------------------------------- main ----------------------------------- #
if __name__ == "__main__":
    Cin, Cout, H, W = 4, 8, 16, 16

    key = jax.random.PRNGKey(0)
    kx1, kx2, kp = jax.random.split(key, 3)
    ks = jax.random.split(kp, 14)

    params = dict(
        w0=0.3 * jax.random.normal(ks[0], (Cout, Cin, 1, 1), jnp.float32),
        b0=0.1 * jax.random.normal(ks[1], (Cout,), jnp.float32),
        w1=0.1 * jax.random.normal(ks[2], (Cout, Cout, 3, 3), jnp.float32),
        b1=0.1 * jax.random.normal(ks[3], (Cout,), jnp.float32),
        gamma1=jax.random.uniform(ks[4], (Cout,), minval=0.5, maxval=1.5),
        beta1=0.1 * jax.random.normal(ks[5], (Cout,), jnp.float32),
        mean1=0.1 * jax.random.normal(ks[6], (Cout,), jnp.float32),
        var1=jax.random.uniform(ks[7], (Cout,), minval=0.5, maxval=1.5),
        w2=0.1 * jax.random.normal(ks[8], (Cout, Cout, 3, 3), jnp.float32),
        b2=0.1 * jax.random.normal(ks[9], (Cout,), jnp.float32),
        gamma2=jax.random.uniform(ks[10], (Cout,), minval=0.5, maxval=1.5),
        beta2=0.1 * jax.random.normal(ks[11], (Cout,), jnp.float32),
        mean2=0.1 * jax.random.normal(ks[12], (Cout,), jnp.float32),
        var2=jax.random.uniform(ks[13], (Cout,), minval=0.5, maxval=1.5),
    )

    # one-time weight preparation (reused by every forward call)
    prep = prepare_basic_blocks(params, W)

    # (N=2, auto nb) and (N=4, auto nb) exercise the device-dependent grid
    # choice; (N=2, nb=1) explicitly exercises the single-image-per-step
    # (no-boundary-mask) code path on any device.
    for N, kx, nb in ((2, kx1, None), (2, kx1, 1), (4, kx2, None)):
        x = jax.random.normal(kx, (N, Cin, H, W), jnp.float32)
        out = jax.block_until_ready(basic_blocks_pallas(x, prep, nb=nb))
        ref = jax.block_until_ready(_ref_forward(x, params))
        # bf16 matmul operands (f32 accumulation) -> loosened tolerance.
        np.testing.assert_allclose(np.asarray(out), np.asarray(ref),
                                   rtol=3e-2, atol=3e-2)

    print("KERNEL_OK")
</pallas_src>

<mosaic_0001>
module attributes {stable_mosaic.version = 11 : i64} {
  func.func @_basic_blocks_kernel(%arg0: i32, %arg1: memref<32x64xbf16, #tpu.memory_space<vmem>>, %arg2: memref<64x128xbf16, #tpu.memory_space<vmem>>, %arg3: memref<384x128xbf16, #tpu.memory_space<vmem>>, %arg4: memref<384x128xbf16, #tpu.memory_space<vmem>>, %arg5: memref<8x128xf32, #tpu.memory_space<vmem>>, %arg6: memref<32x128xf32, #tpu.memory_space<vmem>>) attributes {dimension_semantics = [#tpu.dimension_semantics<parallel>], iteration_bounds = array<i64: 1>, scalar_prefetch = 0 : i64, scratch_operands = 0 : i64, tpu.core_type = #tpu.core_type<tc>, window_params = [{transform_indices = @transform_0, window_bounds = array<i64: 32, 64>}, {pipeline_mode = #tpu.pipeline_mode<synchronous>, transform_indices = @transform_1, window_bounds = array<i64: 64, 128>}, {pipeline_mode = #tpu.pipeline_mode<synchronous>, transform_indices = @transform_2, window_bounds = array<i64: 384, 128>}, {pipeline_mode = #tpu.pipeline_mode<synchronous>, transform_indices = @transform_3, window_bounds = array<i64: 384, 128>}, {pipeline_mode = #tpu.pipeline_mode<synchronous>, transform_indices = @transform_4, window_bounds = array<i64: 8, 128>}, {transform_indices = @transform_5, window_bounds = array<i64: 32, 128>}]} {
    %c0 = arith.constant 0 : index
    %c0_0 = arith.constant 0 : index
    %0 = vector.load %arg5[%c0, %c0_0] : memref<8x128xf32, #tpu.memory_space<vmem>>, vector<8x128xf32>
    %1 = vector.extract_strided_slice %0 {offsets = [0, 0], sizes = [1, 128], strides = [1, 1]} : vector<8x128xf32> to vector<1x128xf32>
    %2 = vector.extract_strided_slice %0 {offsets = [1, 0], sizes = [1, 128], strides = [1, 1]} : vector<8x128xf32> to vector<1x128xf32>
    %3 = vector.extract_strided_slice %0 {offsets = [2, 0], sizes = [1, 128], strides = [1, 1]} : vector<8x128xf32> to vector<1x128xf32>
    %4 = vector.extract_strided_slice %0 {offsets = [3, 0], sizes = [1, 128], strides = [1, 1]} : vector<8x128xf32> to vector<1x128xf32>
    %5 = vector.extract_strided_slice %0 {offsets = [4, 0], sizes = [1, 128], strides = [1, 1]} : vector<8x128xf32> to vector<1x128xf32>
    %c0_1 = arith.constant 0 : index
    %c0_2 = arith.constant 0 : index
    %6 = vector.load %arg1[%c0_1, %c0_2] : memref<32x64xbf16, #tpu.memory_space<vmem>>, vector<32x64xbf16>
    %c0_3 = arith.constant 0 : index
    %c0_4 = arith.constant 0 : index
    %7 = vector.load %arg2[%c0_3, %c0_4] : memref<64x128xbf16, #tpu.memory_space<vmem>>, vector<64x128xbf16>
    %cst = arith.constant dense<0.000000e+00> : vector<32x128xf32>
    %8 = tpu.matmul %6, %7, %cst {dimension_numbers = #tpu.dot_dimension_numbers<[1], [0], [0], [1], [0, 0, 1, 1], [], []>} : vector<32x64xbf16>, vector<64x128xbf16>, vector<32x128xf32> -> vector<32x128xf32>
    %9 = vector.broadcast %1 : vector<1x128xf32> to vector<32x128xf32>
    %10 = arith.addf %8, %9 : vector<32x128xf32>
    %11 = arith.truncf %10 : vector<32x128xf32> to vector<32x128xbf16>
    %cst_5 = arith.constant 0.000000e+00 : bf16
    %12 = vector.broadcast %cst_5 : bf16 to vector<1x128xbf16>
    %13 = tpu.iota {dimensions = array<i32: 0>} : vector<32x1xi32>
    %c16_i32 = arith.constant 16 : i32
    %c0_i32 = arith.constant 0 : i32
    %14 = arith.cmpi eq, %c16_i32, %c0_i32 : i32
    %c1_i32 = arith.constant 1 : i32
    %15 = arith.select %14, %c1_i32, %c16_i32 : i32
    %16 = vector.broadcast %15 : i32 to vector<32x1xi32>
    %17 = arith.remsi %13, %16 : vector<32x1xi32>
    %c0_i32_6 = arith.constant 0 : i32
    %18 = vector.broadcast %c0_i32_6 : i32 to vector<32x1xi32>
    %19 = arith.cmpi ne, %17, %18 : vector<32x1xi32>
    %c0_i32_7 = arith.constant 0 : i32
    %20 = vector.broadcast %c0_i32_7 : i32 to vector<32x1xi32>
    %21 = arith.cmpi slt, %17, %20 : vector<32x1xi32>
    %c0_i32_8 = arith.constant 0 : i32
    %22 = arith.cmpi slt, %15, %c0_i32_8 : i32
    %23 = vector.broadcast %22 : i1 to vector<32x1xi1>
    %24 = vector.broadcast %23 : vector<32x1xi1> to vector<32x1xi1>
    %25 = arith.xori %21, %24 : vector<32x1xi1>
    %26 = arith.andi %25, %19 : vector<32x1xi1>
    %27 = vector.broadcast %15 : i32 to vector<32x1xi32>
    %28 = arith.addi %17, %27 : vector<32x1xi32>
    %29 = arith.select %26, %28, %17 : vector<32x1xi1>, vector<32x1xi32>
    %c0_i32_9 = arith.constant 0 : i32
    %30 = vector.broadcast %c0_i32_9 : i32 to vector<32x1xi32>
    %31 = arith.cmpi ne, %29, %30 : vector<32x1xi32>
    %32 = arith.extui %31 : vector<32x1xi1> to vector<32x1xi32>
    %33 = arith.sitofp %32 : vector<32x1xi32> to vector<32x1xf32>
    %34 = arith.truncf %33 : vector<32x1xf32> to vector<32x1xbf16>
    %c15_i32 = arith.constant 15 : i32
    %35 = vector.broadcast %c15_i32 : i32 to vector<32x1xi32>
    %36 = arith.cmpi ne, %29, %35 : vector<32x1xi32>
    %37 = arith.extui %36 : vector<32x1xi1> to vector<32x1xi32>
    %38 = arith.sitofp %37 : vector<32x1xi32> to vector<32x1xf32>
    %39 = arith.truncf %38 : vector<32x1xf32> to vector<32x1xbf16>
    %40 = vector.extract_strided_slice %11 {offsets = [0, 0], sizes = [31, 128], strides = [1, 1]} : vector<32x128xbf16> to vector<31x128xbf16>
    %41 = tpu.concatenate %12, %40 in 0 : vector<1x128xbf16>, vector<31x128xbf16> -> vector<32x128xbf16>
    %42 = vector.extract_strided_slice %11 {offsets = [1, 0], sizes = [31, 128], strides = [1, 1]} : vector<32x128xbf16> to vector<31x128xbf16>
    %43 = tpu.concatenate %42, %12 in 0 : vector<31x128xbf16>, vector<1x128xbf16> -> vector<32x128xbf16>
    %44 = vector.broadcast %34 : vector<32x1xbf16> to vector<32x128xbf16>
    %45 = arith.mulf %41, %44 : vector<32x128xbf16>
    %46 = vector.broadcast %39 : vector<32x1xbf16> to vector<32x128xbf16>
    %47 = arith.mulf %43, %46 : vector<32x128xbf16>
    %c0_10 = arith.constant 0 : index
    %c0_11 = arith.constant 0 : index
    %48 = vector.load %arg3[%c0_10, %c0_11] : memref<384x128xbf16, #tpu.memory_space<vmem>>, vector<128x128xbf16>
    %cst_12 = arith.constant dense<0.000000e+00> : vector<32x128xf32>
    %49 = tpu.matmul %45, %48, %cst_12 {dimension_numbers = #tpu.dot_dimension_numbers<[1], [0], [0], [1], [0, 0, 1, 1], [], []>} : vector<32x128xbf16>, vector<128x128xbf16>, vector<32x128xf32> -> vector<32x128xf32>
    %c128 = arith.constant 128 : index
    %c0_13 = arith.constant 0 : index
    %50 = vector.load %arg3[%c128, %c0_13] : memref<384x128xbf16, #tpu.memory_space<vmem>>, vector<128x128xbf16>
    %cst_14 = arith.constant dense<0.000000e+00> : vector<32x128xf32>
    %51 = tpu.matmul %11, %50, %cst_14 {dimension_numbers = #tpu.dot_dimension_numbers<[1], [0], [0], [1], [0, 0, 1, 1], [], []>} : vector<32x128xbf16>, vector<128x128xbf16>, vector<32x128xf32> -> vector<32x128xf32>
    %52 = arith.addf %49, %51 : vector<32x128xf32>
    %c256 = arith.constant 256 : index
    %c0_15 = arith.constant 0 : index
    %53 = vector.load %arg3[%c256, %c0_15] : memref<384x128xbf16, #tpu.memory_space<vmem>>, vector<128x128xbf16>
    %cst_16 = arith.constant dense<0.000000e+00> : vector<32x128xf32>
    %54 = tpu.matmul %47, %53, %cst_16 {dimension_numbers = #tpu.dot_dimension_numbers<[1], [0], [0], [1], [0, 0, 1, 1], [], []>} : vector<32x128xbf16>, vector<128x128xbf16>, vector<32x128xf32> -> vector<32x128xf32>
    %55 = arith.addf %52, %54 : vector<32x128xf32>
    %56 = vector.broadcast %2 : vector<1x128xf32> to vector<32x128xf32>
    %57 = arith.mulf %55, %56 : vector<32x128xf32>
    %58 = vector.broadcast %3 : vector<1x128xf32> to vector<32x128xf32>
    %59 = arith.addf %57, %58 : vector<32x128xf32>
    %cst_17 = arith.constant 0.000000e+00 : f32
    %60 = vector.broadcast %cst_17 : f32 to vector<32x128xf32>
    %61 = arith.maximumf %59, %60 : vector<32x128xf32>
    %62 = arith.truncf %61 : vector<32x128xf32> to vector<32x128xbf16>
    %63 = vector.extract_strided_slice %62 {offsets = [0, 0], sizes = [31, 128], strides = [1, 1]} : vector<32x128xbf16> to vector<31x128xbf16>
    %64 = tpu.concatenate %12, %63 in 0 : vector<1x128xbf16>, vector<31x128xbf16> -> vector<32x128xbf16>
    %65 = vector.extract_strided_slice %62 {offsets = [1, 0], sizes = [31, 128], strides = [1, 1]} : vector<32x128xbf16> to vector<31x128xbf16>
    %66 = tpu.concatenate %65, %12 in 0 : vector<31x128xbf16>, vector<1x128xbf16> -> vector<32x128xbf16>
    %67 = vector.broadcast %34 : vector<32x1xbf16> to vector<32x128xbf16>
    %68 = arith.mulf %64, %67 : vector<32x128xbf16>
    %69 = vector.broadcast %39 : vector<32x1xbf16> to vector<32x128xbf16>
    %70 = arith.mulf %66, %69 : vector<32x128xbf16>
    %c0_18 = arith.constant 0 : index
    %c0_19 = arith.constant 0 : index
    %71 = vector.load %arg4[%c0_18, %c0_19] : memref<384x128xbf16, #tpu.memory_space<vmem>>, vector<128x128xbf16>
    %cst_20 = arith.constant dense<0.000000e+00> : vector<32x128xf32>
    %72 = tpu.matmul %68, %71, %cst_20 {dimension_numbers = #tpu.dot_dimension_numbers<[1], [0], [0], [1], [0, 0, 1, 1], [], []>} : vector<32x128xbf16>, vector<128x128xbf16>, vector<32x128xf32> -> vector<32x128xf32>
    %c128_21 = arith.constant 128 : index
    %c0_22 = arith.constant 0 : index
    %73 = vector.load %arg4[%c128_21, %c0_22] : memref<384x128xbf16, #tpu.memory_space<vmem>>, vector<128x128xbf16>
    %cst_23 = arith.constant dense<0.000000e+00> : vector<32x128xf32>
    %74 = tpu.matmul %62, %73, %cst_23 {dimension_numbers = #tpu.dot_dimension_numbers<[1], [0], [0], [1], [0, 0, 1, 1], [], []>} : vector<32x128xbf16>, vector<128x128xbf16>, vector<32x128xf32> -> vector<32x128xf32>
    %75 = arith.addf %72, %74 : vector<32x128xf32>
    %c256_24 = arith.constant 256 : index
    %c0_25 = arith.constant 0 : index
    %76 = vector.load %arg4[%c256_24, %c0_25] : memref<384x128xbf16, #tpu.memory_space<vmem>>, vector<128x128xbf16>
    %cst_26 = arith.constant dense<0.000000e+00> : vector<32x128xf32>
    %77 = tpu.matmul %70, %76, %cst_26 {dimension_numbers = #tpu.dot_dimension_numbers<[1], [0], [0], [1], [0, 0, 1, 1], [], []>} : vector<32x128xbf16>, vector<128x128xbf16>, vector<32x128xf32> -> vector<32x128xf32>
    %78 = arith.addf %75, %77 : vector<32x128xf32>
    %79 = vector.broadcast %4 : vector<1x128xf32> to vector<32x128xf32>
    %80 = arith.mulf %78, %79 : vector<32x128xf32>
    %81 = vector.broadcast %5 : vector<1x128xf32> to vector<32x128xf32>
    %82 = arith.addf %80, %81 : vector<32x128xf32>
    %cst_27 = arith.constant 0.000000e+00 : f32
    %83 = vector.broadcast %cst_27 : f32 to vector<32x128xf32>
    %84 = arith.maximumf %82, %83 : vector<32x128xf32>
    %85 = arith.addf %84, %10 : vector<32x128xf32>
    %c0_28 = arith.constant 0 : index
    %c0_29 = arith.constant 0 : index
    %86 = vector.load %arg6[%c0_28, %c0_29] : memref<32x128xf32, #tpu.memory_space<vmem>>, vector<32x128xf32>
    tpu.vector_store %arg6[%c0_28, %c0_29], %85 {strides = array<i32>} : memref<32x128xf32, #tpu.memory_space<vmem>>, vector<32x128xf32>,
    return
  }
  func.func @transform_0(%arg0: i32) -> (i32, i32) {
    %c0_i32 = arith.constant 0 : i32
    %c0_i32_0 = arith.constant 0 : i32
    return %arg0, %c0_i32 : i32, i32
  }
  func.func @transform_1(%arg0: i32) -> (i32, i32) {
    %c0_i32 = arith.constant 0 : i32
    %c0_i32_0 = arith.constant 0 : i32
    %c0_i32_1 = arith.constant 0 : i32
    return %c0_i32, %c0_i32_0 : i32, i32
  }
  func.func @transform_2(%arg0: i32) -> (i32, i32) {
    %c0_i32 = arith.constant 0 : i32
    %c0_i32_0 = arith.constant 0 : i32
    %c0_i32_1 = arith.constant 0 : i32
    return %c0_i32, %c0_i32_0 : i32, i32
  }
  func.func @transform_3(%arg0: i32) -> (i32, i32) {
    %c0_i32 = arith.constant 0 : i32
    %c0_i32_0 = arith.constant 0 : i32
    %c0_i32_1 = arith.constant 0 : i32
    return %c0_i32, %c0_i32_0 : i32, i32
  }
  func.func @transform_4(%arg0: i32) -> (i32, i32) {
    %c0_i32 = arith.constant 0 : i32
    %c0_i32_0 = arith.constant 0 : i32
    %c0_i32_1 = arith.constant 0 : i32
    return %c0_i32, %c0_i32_0 : i32, i32
  }
  func.func @transform_5(%arg0: i32) -> (i32, i32) {
    %c0_i32 = arith.constant 0 : i32
    %c0_i32_0 = arith.constant 0 : i32
    return %arg0, %c0_i32 : i32, i32
  }
}

</mosaic_0001>

<llo_original>
// kernel: _forward.1
$region0: #{_forward.1}
  #allocation0 [shape = 'u32[]', space=smem, size = 0x4, offset = 0x4, fixed_abs, tag = 'smem constant byte address 0x4 - core index']
  #allocation1 [shape = 'u32[144,128]{1,0:T(1,128)}', space=vmem, size = 0x12000, scoped, tag = 'internal scratch']
  %s0 = inlined_call_operand.vmem [shape: bf16[32,64], index: 0, kind: input, shape index: {}]
  %s1 = inlined_call_operand.vmem [shape: bf16[64,128], index: 1, kind: input, shape index: {}]
  %s2 = inlined_call_operand.vmem [shape: bf16[384,128], index: 2, kind: input, shape index: {}]
  %s3 = inlined_call_operand.vmem [shape: bf16[384,128], index: 3, kind: input, shape index: {}]
  %s4 = inlined_call_operand.vmem [shape: f32[8,128], index: 4, kind: input, shape index: {}]
  %s5 = inlined_call_operand.vmem [shape: f32[32,128], index: 5, kind: output, shape index: {}]
  %s6 = sld [smem:[#allocation0]]
  $region30: #{_forward.1} parent=0
    _
  %s8 = ssub.s32 1, %s6
  %s9 = scalar_select 0, %s8, %s6
  // Predicated region
  $region2: #{_forward.1} parent=0 // pred_check
    _
  $region3: #{_forward.1} parent=0 // pred_check_branch
    %11 = sbr.rel (0) target = $region5
  $region4: #{_forward.1} parent=0 // pred_region
    _
  $region5: #{_forward.1} parent=0 // pred_fallthru
    _
  // Predicated region
  $region6: #{_forward.1} parent=0 // pred_check
    _
  $region7: #{_forward.1} parent=0 // pred_check_branch
    %13 = sbr.rel (0) target = $region9
  $region8: #{_forward.1} parent=0 // pred_region
    _
  $region9: #{_forward.1} parent=0 // pred_fallthru
    _
  // Predicated region
  $region10: #{_forward.1} parent=0 // pred_check
    _
  $region11: #{_forward.1} parent=0 // pred_check_branch
    %15 = sbr.rel (0) target = $region13
  $region12: #{_forward.1} parent=0 // pred_region
    _
  $region13: #{_forward.1} parent=0 // pred_fallthru
    _
  // Predicated region
  $region14: #{_forward.1} parent=0 // pred_check
    _
  $region15: #{_forward.1} parent=0 // pred_check_branch
    %17 = sbr.rel (0) target = $region17
  $region16: #{_forward.1} parent=0 // pred_region
    _
  $region17: #{_forward.1} parent=0 // pred_fallthru
    _
  // Predicated region
  $region18: #{_forward.1} parent=0 // pred_check
    _
  $region19: #{_forward.1} parent=0 // pred_check_branch
    %19 = sbr.rel (0) target = $region21
  $region20: #{_forward.1} parent=0 // pred_region
    _
  $region21: #{_forward.1} parent=0 // pred_fallthru
    _
  %v21 = vld [vmem:[%s4] sm:$0xff]
  %v22 = vld [vmem:[%s0] sm:$0xf]
  %v23 = vld [vmem:[%s0 + $0x4] sm:$0xf]
  %v24 = vld [vmem:[%s0 + $0x8] sm:$0xf]
  %v25 = vld [vmem:[%s0 + $0xc] sm:$0xf]
  %v26 = vld [vmem:[%s1] sm:$0xf]
  %v27 = vld [vmem:[%s1 + $0x4] sm:$0xf]
  %v28 = vld [vmem:[%s1 + $0x8] sm:$0xf]
  %v29 = vld [vmem:[%s1 + $0xc] sm:$0xf]
  %v30 = vld [vmem:[%s1 + $0x10] sm:$0xf]
  %v31 = vld [vmem:[%s1 + $0x14] sm:$0xf]
  %v32 = vld [vmem:[%s1 + $0x18] sm:$0xf]
  %v33 = vld [vmem:[%s1 + $0x1c] sm:$0xf]
  %v34 = vlaneseq
  %v35 = vshrl.u32 %v34, 7
  %v36 = vsub.s32 0, %v35
  %v37 = vrot.slane %v21, %v36
  %v42 = vunpack.c.l.b16 %v22
  %v43 = vunpack.c.l.b16 %v23
  %v44 = vunpack.c.l.b16 %v24
  %v45 = vunpack.c.l.b16 %v25
  %v46 = vpack.c.b16 %v43, %v42
  %v47 = vpack.c.b16 %v45, %v44
  %v56 = vunpack.c.l.b16 %v26
  %v57 = vunpack.c.l.b16 %v27
  %v58 = vunpack.c.l.b16 %v28
  %v59 = vunpack.c.l.b16 %v29
  %v60 = vunpack.c.l.b16 %v30
  %v61 = vunpack.c.l.b16 %v31
  %v62 = vunpack.c.l.b16 %v32
  %v63 = vunpack.c.l.b16 %v33
  %v64 = vpack.c.b16 %v57, %v56
  %v65 = vpack.c.b16 %v59, %v58
  %v66 = vpack.c.b16 %v61, %v60
  %v67 = vpack.c.b16 %v63, %v62
  %vm72 = vcmask 523264
  %v74 = vsel %vm72, %v46, 0
  %v77 = vsel %vm72, %v47, 0
  %79 = vmatprep.subr.bf16.mxu0 0
  %80 = vmatpush1.bf16.msra.mxu0 0
  %81 = vmatprep.subr.bf16.mxu0 0
  %82 = vmatpush1.bf16.msra.mxu0 0
  %83 = vmatprep.subr.bf16.mxu0 0
  %84 = vmatpush1.bf16.msra.mxu0 0
  %85 = vmatprep.subr.bf16.mxu0 0
  %86 = vmatpush1.bf16.msra.mxu0 0
  %87 = vmatprep.subr.bf16.mxu0 0
  %88 = vmatpush1.bf16.msra.mxu0 %v67
  %89 = vmatprep.subr.bf16.mxu0 0
  %90 = vmatpush1.bf16.msra.mxu0 %v66
  %91 = vmatprep.subr.bf16.mxu0 0
  %92 = vmatpush1.bf16.msra.mxu0 %v65
  %93 = vmatprep.subr.bf16.mxu0 0
  %94 = vmatpush1.bf16.msra.mxu0 %v64
  %95 = vmatprep.subr.bf16.mxu0 0
  %96 = vmatpush2.bf16.msra.mxu0 0
  %97 = vmatprep.subr.bf16.mxu0 0
  %98 = vmatpush2.bf16.msra.mxu0 0
  %99 = vmatprep.subr.bf16.mxu0 0
  %100 = vmatpush2.bf16.msra.mxu0 0
  %101 = vmatprep.subr.bf16.mxu0 0
  %102 = vmatpush2.bf16.msra.mxu0 0
  %103 = vmatprep.subr.bf16.mxu0 0
  %104 = vmatpush2.bf16.msra.mxu0 0
  %105 = vmatprep.subr.bf16.mxu0 0
  %106 = vmatpush2.bf16.msra.mxu0 0
  %107 = vmatprep.subr.bf16.mxu0 0
  %108 = vmatpush2.bf16.msra.mxu0 0
  %109 = vmatprep.subr.bf16.mxu0 0
  %110 = vmatpush2.bf16.msra.mxu0 0
  %111 = vmatprep.mubr.bf16.mxu0 0
  %112 = vmatmul.mubr.bf16.gmra.mxu0 %v74
  %v113 = vpop.f32.mrf.mxu0
  %v114 = vadd.f32 %v37, %v113
  %v115 = vpop.f32.mrf.mxu0
  %v116 = vpop.f32.mrf.mxu0
  %v117 = vadd.f32 %v37, %v116
  %v118 = vpop.f32.mrf.mxu0
  %119 = vmatprep.mubr.bf16.mxu0 0
  %120 = vmatmul.mubr.bf16.gmra.mxu0 %v77
  %v121 = vpop.f32.mrf.mxu0
  %v122 = vadd.f32 %v37, %v121
  %v123 = vpop.f32.mrf.mxu0
  %v124 = vpop.f32.mrf.mxu0
  %v125 = vadd.f32 %v37, %v124
  %v126 = vpop.f32.mrf.mxu0
  %127 = vdwg.mxu0
  %v128 = vpack.c.bf16 %v117, %v114
  %v129 = vpack.c.bf16 %v125, %v122
  %v130 = vlaneseq
  %v131 = vshrl.u32 %v130, 7
  %v132 = vadd.s32 %v131, 8
  %v133 = vadd.s32 %v131, 16
  %v134 = vadd.s32 %v131, 24
  %vm135 = vcmp.lt.s32.totalorder %v131, 0
  %v136 = vsub.s32 0, %v131
  %v137 = vsel %vm135, %v136, %v131
  %v138 = vshrl.u32 %v137, 4
  %v139 = vand.u32 %v137, 15
  %v140 = vsub.s32 0, %v139
  %v141 = vsel %vm135, %v140, %v139
  %vm142 = vcmp.lt.s32.totalorder %v132, 0
  %v143 = vsub.s32 0, %v132
  %v144 = vsel %vm142, %v143, %v132
  %v145 = vshrl.u32 %v144, 4
  %v146 = vand.u32 %v144, 15
  %v147 = vsub.s32 0, %v146
  %v148 = vsel %vm142, %v147, %v146
  %vm149 = vcmp.lt.s32.totalorder %v133, 0
  %v150 = vsub.s32 0, %v133
  %v151 = vsel %vm149, %v150, %v133
  %v152 = vshrl.u32 %v151, 4
  %v153 = vand.u32 %v151, 15
  %v154 = vsub.s32 0, %v153
  %v155 = vsel %vm149, %v154, %v153
  %vm156 = vcmp.lt.s32.totalorder %v134, 0
  %v157 = vsub.s32 0, %v134
  %v158 = vsel %vm156, %v157, %v134
  %v159 = vshrl.u32 %v158, 4
  %v160 = vand.u32 %v158, 15
  %v161 = vsub.s32 0, %v160
  %v162 = vsel %vm156, %v161, %v160
  %vm163 = vcmp.ne.s32.totalorder %v141, 0
  %vm164 = vcmp.ne.s32.totalorder %v148, 0
  %vm165 = vcmp.ne.s32.totalorder %v155, 0
  %vm166 = vcmp.ne.s32.totalorder %v162, 0
  %vm167 = vcmp.lt.s32.totalorder %v141, 0
  %vm168 = vcmp.lt.s32.totalorder %v148, 0
  %vm169 = vcmp.lt.s32.totalorder %v155, 0
  %vm170 = vcmp.lt.s32.totalorder %v162, 0
  %vm171 = vmand %vm167, %vm163
  %vm172 = vmand %vm168, %vm164
  %vm173 = vmand %vm169, %vm165
  %vm174 = vmand %vm170, %vm166
  %v175 = vadd.s32 %v141, 16
  %v176 = vadd.s32 %v148, 16
  %v177 = vadd.s32 %v155, 16
  %v178 = vadd.s32 %v162, 16
  %v179 = vsel %vm171, %v175, %v141
  %v180 = vsel %vm172, %v176, %v148
  %v181 = vsel %vm173, %v177, %v155
  %v182 = vsel %vm174, %v178, %v162
  %vm183 = vcmp.ne.s32.totalorder %v179, 0
  %vm184 = vcmp.ne.s32.totalorder %v180, 0
  %vm185 = vcmp.ne.s32.totalorder %v181, 0
  %vm186 = vcmp.ne.s32.totalorder %v182, 0
  %v187 = vsel %vm183, 1, 0
  %v188 = vsel %vm184, 1, 0
  %v189 = vsel %vm185, 1, 0
  %v190 = vsel %vm186, 1, 0
  %v191 = vcvt.s32.f32 %v187
  %v192 = vcvt.s32.f32 %v188
  %v193 = vcvt.s32.f32 %v189
  %v194 = vcvt.s32.f32 %v190
  %v195 = vpack.c.bf16 %v192, %v191
  %v196 = vpack.c.bf16 %v194, %v193
  %vm197 = vcmp.ne.s32.totalorder %v179, 15
  %vm198 = vcmp.ne.s32.totalorder %v180, 15
  %vm199 = vcmp.ne.s32.totalorder %v181, 15
  %vm200 = vcmp.ne.s32.totalorder %v182, 15
  %v201 = vsel %vm197, 1, 0
  %v202 = vsel %vm198, 1, 0
  %v203 = vsel %vm199, 1, 0
  %v204 = vsel %vm200, 1, 0
  %v205 = vcvt.s32.f32 %v201
  %v206 = vcvt.s32.f32 %v202
  %v207 = vcvt.s32.f32 %v203
  %v208 = vcvt.s32.f32 %v204
  %v209 = vpack.c.bf16 %v206, %v205
  %v210 = vpack.c.bf16 %v208, %v207
  %vm211 = vsmask.f32 256
  %v213 = vshrl.u32 %v128, 16
  %v215 = vrot.slane %v213, 7
  %v216 = vshll.u32 %v128, 16
  %v218 = vor.u32 %v215, %v216
  %v220 = vshrl.u32 %v129, 16
  %v222 = vrot.slane %v220, 7
  %v223 = vshll.u32 %v129, 16
  %v225 = vor.u32 %v222, %v223
  %v226 = vsel %vm211, %v215, %v225
  %vm229 = vcmask 1040384
  %vm230 = vmand %vm229, %vm211
  %v231 = vsel %vm230, 0, %v218
  %vm232 = vsmask.f32 7424
  %v233 = vrot.slane %v216, 1
  %v234 = vor.u32 %v213, %v233
  %v235 = vrot.slane %v223, 1
  %v236 = vsel %vm232, %v234, %v235
  %v237 = vor.u32 %v220, %v235
  %vm240 = vcmask 1047552
  %vm241 = vmand %vm240, %vm232
  %v242 = vsel %vm241, %v237, 0
  %v243 = vmul.bf16 %v231, %v195
  %v244 = vmul.bf16 %v226, %v196
  %v245 = vmul.bf16 %v236, %v209
  %v246 = vmul.bf16 %v242, %v210
  %v247 = vld [vmem:[%s2] sm:$0xf]
  %v248 = vld [vmem:[%s2 + $0x4] sm:$0xf]
  %v249 = vld [vmem:[%s2 + $0x8] sm:$0xf]
  %v250 = vld [vmem:[%s2 + $0xc] sm:$0xf]
  %v251 = vld [vmem:[%s2 + $0x10] sm:$0xf]
  %v252 = vld [vmem:[%s2 + $0x14] sm:$0xf]
  %v253 = vld [vmem:[%s2 + $0x18] sm:$0xf]
  %v254 = vld [vmem:[%s2 + $0x1c] sm:$0xf]
  %v255 = vld [vmem:[%s2 + $0x20] sm:$0xf]
  %v256 = vld [vmem:[%s2 + $0x24] sm:$0xf]
  %v257 = vld [vmem:[%s2 + $0x28] sm:$0xf]
  %v258 = vld [vmem:[%s2 + $0x2c] sm:$0xf]
  %v259 = vld [vmem:[%s2 + $0x30] sm:$0xf]
  %v260 = vld [vmem:[%s2 + $0x34] sm:$0xf]
  %v261 = vld [vmem:[%s2 + $0x38] sm:$0xf]
  %v262 = vld [vmem:[%s2 + $0x3c] sm:$0xf]
  %v263 = vld [vmem:[%s2 + $0x40] sm:$0xf]
  %v264 = vld [vmem:[%s2 + $0x44] sm:$0xf]
  %v265 = vld [vmem:[%s2 + $0x48] sm:$0xf]
  %v266 = vld [vmem:[%s2 + $0x4c] sm:$0xf]
  %v267 = vld [vmem:[%s2 + $0x50] sm:$0xf]
  %v268 = vld [vmem:[%s2 + $0x54] sm:$0xf]
  %v269 = vld [vmem:[%s2 + $0x58] sm:$0xf]
  %v270 = vld [vmem:[%s2 + $0x5c] sm:$0xf]
  %v271 = vld [vmem:[%s2 + $0x60] sm:$0xf]
  %v272 = vld [vmem:[%s2 + $0x64] sm:$0xf]
  %v273 = vld [vmem:[%s2 + $0x68] sm:$0xf]
  %v274 = vld [vmem:[%s2 + $0x6c] sm:$0xf]
  %v275 = vld [vmem:[%s2 + $0x70] sm:$0xf]
  %v276 = vld [vmem:[%s2 + $0x74] sm:$0xf]
  %v277 = vld [vmem:[%s2 + $0x78] sm:$0xf]
  %v278 = vld [vmem:[%s2 + $0x7c] sm:$0xf]
  %v295 = vunpack.c.l.b16 %v263
  %v296 = vunpack.c.l.b16 %v264
  %v297 = vunpack.c.l.b16 %v265
  %v298 = vunpack.c.l.b16 %v266
  %v299 = vunpack.c.l.b16 %v267
  %v300 = vunpack.c.l.b16 %v268
  %v301 = vunpack.c.l.b16 %v269
  %v302 = vunpack.c.l.b16 %v270
  %v303 = vunpack.c.l.b16 %v271
  %v304 = vunpack.c.l.b16 %v272
  %v305 = vunpack.c.l.b16 %v273
  %v306 = vunpack.c.l.b16 %v274
  %v307 = vunpack.c.l.b16 %v275
  %v308 = vunpack.c.l.b16 %v276
  %v309 = vunpack.c.l.b16 %v277
  %v310 = vunpack.c.l.b16 %v278
  %v311 = vpack.c.b16 %v296, %v295
  %v312 = vpack.c.b16 %v298, %v297
  %v313 = vpack.c.b16 %v300, %v299
  %v314 = vpack.c.b16 %v302, %v301
  %v315 = vpack.c.b16 %v304, %v303
  %v316 = vpack.c.b16 %v306, %v305
  %v317 = vpack.c.b16 %v308, %v307
  %v318 = vpack.c.b16 %v310, %v309
  %327 = vmatprep.subr.bf16.mxu0 0
  %328 = vmatpush1.bf16.msra.mxu0 %v318
  %329 = vmatprep.subr.bf16.mxu0 0
  %330 = vmatpush1.bf16.msra.mxu0 %v317
  %331 = vmatprep.subr.bf16.mxu0 0
  %332 = vmatpush1.bf16.msra.mxu0 %v316
  %333 = vmatprep.subr.bf16.mxu0 0
  %334 = vmatpush1.bf16.msra.mxu0 %v315
  %335 = vmatprep.subr.bf16.mxu0 0
  %336 = vmatpush1.bf16.msra.mxu0 %v314
  %337 = vmatprep.subr.bf16.mxu0 0
  %338 = vmatpush1.bf16.msra.mxu0 %v313
  %339 = vmatprep.subr.bf16.mxu0 0
  %340 = vmatpush1.bf16.msra.mxu0 %v312
  %341 = vmatprep.subr.bf16.mxu0 0
  %342 = vmatpush1.bf16.msra.mxu0 %v311
  %343 = vmatprep.subr.bf16.mxu0 0
  %344 = vmatpush2.bf16.msra.mxu0 0
  %345 = vmatprep.subr.bf16.mxu0 0
  %346 = vmatpush2.bf16.msra.mxu0 0
  %347 = vmatprep.subr.bf16.mxu0 0
  %348 = vmatpush2.bf16.msra.mxu0 0
  %349 = vmatprep.subr.bf16.mxu0 0
  %350 = vmatpush2.bf16.msra.mxu0 0
  %351 = vmatprep.subr.bf16.mxu0 0
  %352 = vmatpush2.bf16.msra.mxu0 0
  %353 = vmatprep.subr.bf16.mxu0 0
  %354 = vmatpush2.bf16.msra.mxu0 0
  %355 = vmatprep.subr.bf16.mxu0 0
  %356 = vmatpush2.bf16.msra.mxu0 0
  %357 = vmatprep.subr.bf16.mxu0 0
  %358 = vmatpush2.bf16.msra.mxu0 0
  %359 = vmatprep.mubr.bf16.mxu0 0
  %360 = vmatmul.mubr.bf16.gmra.mxu0 %v128
  %v361 = vpop.f32.mrf.mxu0
  %v362 = vadd.f32 0.0, %v361
  %v363 = vpop.f32.mrf.mxu0
  %v364 = vpop.f32.mrf.mxu0
  %v365 = vadd.f32 0.0, %v364
  %v366 = vpop.f32.mrf.mxu0
  %367 = vmatprep.mubr.bf16.mxu0 0
  %368 = vmatmul.mubr.bf16.gmra.mxu0 %v129
  %v369 = vpop.f32.mrf.mxu0
  %v370 = vadd.f32 0.0, %v369
  %v371 = vpop.f32.mrf.mxu0
  %v372 = vpop.f32.mrf.mxu0
  %v373 = vadd.f32 0.0, %v372
  %v374 = vpop.f32.mrf.mxu0
  %375 = vdwg.mxu0
  %v392 = vunpack.c.l.b16 %v247
  %v393 = vunpack.c.l.b16 %v248
  %v394 = vunpack.c.l.b16 %v249
  %v395 = vunpack.c.l.b16 %v250
  %v396 = vunpack.c.l.b16 %v251
  %v397 = vunpack.c.l.b16 %v252
  %v398 = vunpack.c.l.b16 %v253
  %v399 = vunpack.c.l.b16 %v254
  %v400 = vunpack.c.l.b16 %v255
  %v401 = vunpack.c.l.b16 %v256
  %v402 = vunpack.c.l.b16 %v257
  %v403 = vunpack.c.l.b16 %v258
  %v404 = vunpack.c.l.b16 %v259
  %v405 = vunpack.c.l.b16 %v260
  %v406 = vunpack.c.l.b16 %v261
  %v407 = vunpack.c.l.b16 %v262
  %v408 = vpack.c.b16 %v393, %v392
  %v409 = vpack.c.b16 %v395, %v394
  %v410 = vpack.c.b16 %v397, %v396
  %v411 = vpack.c.b16 %v399, %v398
  %v412 = vpack.c.b16 %v401, %v400
  %v413 = vpack.c.b16 %v403, %v402
  %v414 = vpack.c.b16 %v405, %v404
  %v415 = vpack.c.b16 %v407, %v406
  %424 = vmatprep.subr.bf16.mxu0 0
  %425 = vmatpush1.bf16.msra.mxu0 %v415
  %426 = vmatprep.subr.bf16.mxu0 0
  %427 = vmatpush1.bf16.msra.mxu0 %v414
  %428 = vmatprep.subr.bf16.mxu0 0
  %429 = vmatpush1.bf16.msra.mxu0 %v413
  %430 = vmatprep.subr.bf16.mxu0 0
  %431 = vmatpush1.bf16.msra.mxu0 %v412
  %432 = vmatprep.subr.bf16.mxu0 0
  %433 = vmatpush1.bf16.msra.mxu0 %v411
  %434 = vmatprep.subr.bf16.mxu0 0
  %435 = vmatpush1.bf16.msra.mxu0 %v410
  %436 = vmatprep.subr.bf16.mxu0 0
  %437 = vmatpush1.bf16.msra.mxu0 %v409
  %438 = vmatprep.subr.bf16.mxu0 0
  %439 = vmatpush1.bf16.msra.mxu0 %v408
  %440 = vmatprep.subr.bf16.mxu0 0
  %441 = vmatpush2.bf16.msra.mxu0 0
  %442 = vmatprep.subr.bf16.mxu0 0
  %443 = vmatpush2.bf16.msra.mxu0 0
  %444 = vmatprep.subr.bf16.mxu0 0
  %445 = vmatpush2.bf16.msra.mxu0 0
  %446 = vmatprep.subr.bf16.mxu0 0
  %447 = vmatpush2.bf16.msra.mxu0 0
  %448 = vmatprep.subr.bf16.mxu0 0
  %449 = vmatpush2.bf16.msra.mxu0 0
  %450 = vmatprep.subr.bf16.mxu0 0
  %451 = vmatpush2.bf16.msra.mxu0 0
  %452 = vmatprep.subr.bf16.mxu0 0
  %453 = vmatpush2.bf16.msra.mxu0 0
  %454 = vmatprep.subr.bf16.mxu0 0
  %455 = vmatpush2.bf16.msra.mxu0 0
  %456 = vmatprep.mubr.bf16.mxu0 0
  %457 = vmatmul.mubr.bf16.gmra.mxu0 %v243
  %v458 = vpop.f32.mrf.mxu0
  %v459 = vadd.f32 %v362, %v458
  %v460 = vpop.f32.mrf.mxu0
  %v461 = vpop.f32.mrf.mxu0
  %v462 = vadd.f32 %v365, %v461
  %v463 = vpop.f32.mrf.mxu0
  %464 = vmatprep.mubr.bf16.mxu0 0
  %465 = vmatmul.mubr.bf16.gmra.mxu0 %v244
  %v466 = vpop.f32.mrf.mxu0
  %v467 = vadd.f32 %v370, %v466
  %v468 = vpop.f32.mrf.mxu0
  %v469 = vpop.f32.mrf.mxu0
  %v470 = vadd.f32 %v373, %v469
  %v471 = vpop.f32.mrf.mxu0
  %472 = vdwg.mxu0
  %v473 = vld [vmem:[%s2 + $0x80] sm:$0xf]
  %v474 = vld [vmem:[%s2 + $0x84] sm:$0xf]
  %v475 = vld [vmem:[%s2 + $0x88] sm:$0xf]
  %v476 = vld [vmem:[%s2 + $0x8c] sm:$0xf]
  %v477 = vld [vmem:[%s2 + $0x90] sm:$0xf]
  %v478 = vld [vmem:[%s2 + $0x94] sm:$0xf]
  %v479 = vld [vmem:[%s2 + $0x98] sm:$0xf]
  %v480 = vld [vmem:[%s2 + $0x9c] sm:$0xf]
  %v481 = vld [vmem:[%s2 + $0xa0] sm:$0xf]
  %v482 = vld [vmem:[%s2 + $0xa4] sm:$0xf]
  %v483 = vld [vmem:[%s2 + $0xa8] sm:$0xf]
  %v484 = vld [vmem:[%s2 + $0xac] sm:$0xf]
  %v485 = vld [vmem:[%s2 + $0xb0] sm:$0xf]
  %v486 = vld [vmem:[%s2 + $0xb4] sm:$0xf]
  %v487 = vld [vmem:[%s2 + $0xb8] sm:$0xf]
  %v488 = vld [vmem:[%s2 + $0xbc] sm:$0xf]
  %v505 = vunpack.c.l.b16 %v473
  %v506 = vunpack.c.l.b16 %v474
  %v507 = vunpack.c.l.b16 %v475
  %v508 = vunpack.c.l.b16 %v476
  %v509 = vunpack.c.l.b16 %v477
  %v510 = vunpack.c.l.b16 %v478
  %v511 = vunpack.c.l.b16 %v479
  %v512 = vunpack.c.l.b16 %v480
  %v513 = vunpack.c.l.b16 %v481
  %v514 = vunpack.c.l.b16 %v482
  %v515 = vunpack.c.l.b16 %v483
  %v516 = vunpack.c.l.b16 %v484
  %v517 = vunpack.c.l.b16 %v485
  %v518 = vunpack.c.l.b16 %v486
  %v519 = vunpack.c.l.b16 %v487
  %v520 = vunpack.c.l.b16 %v488
  %v521 = vpack.c.b16 %v506, %v505
  %v522 = vpack.c.b16 %v508, %v507
  %v523 = vpack.c.b16 %v510, %v509
  %v524 = vpack.c.b16 %v512, %v511
  %v525 = vpack.c.b16 %v514, %v513
  %v526 = vpack.c.b16 %v516, %v515
  %v527 = vpack.c.b16 %v518, %v517
  %v528 = vpack.c.b16 %v520, %v519
  %537 = vmatprep.subr.bf16.mxu0 0
  %538 = vmatpush1.bf16.msra.mxu0 %v528
  %539 = vmatprep.subr.bf16.mxu0 0
  %540 = vmatpush1.bf16.msra.mxu0 %v527
  %541 = vmatprep.subr.bf16.mxu0 0
  %542 = vmatpush1.bf16.msra.mxu0 %v526
  %543 = vmatprep.subr.bf16.mxu0 0
  %544 = vmatpush1.bf16.msra.mxu0 %v525
  %545 = vmatprep.subr.bf16.mxu0 0
  %546 = vmatpush1.bf16.msra.mxu0 %v524
  %547 = vmatprep.subr.bf16.mxu0 0
  %548 = vmatpush1.bf16.msra.mxu0 %v523
  %549 = vmatprep.subr.bf16.mxu0 0
  %550 = vmatpush1.bf16.msra.mxu0 %v522
  %551 = vmatprep.subr.bf16.mxu0 0
  %552 = vmatpush1.bf16.msra.mxu0 %v521
  %553 = vmatprep.subr.bf16.mxu0 0
  %554 = vmatpush2.bf16.msra.mxu0 0
  %555 = vmatprep.subr.bf16.mxu0 0
  %556 = vmatpush2.bf16.msra.mxu0 0
  %557 = vmatprep.subr.bf16.mxu0 0
  %558 = vmatpush2.bf16.msra.mxu0 0
  %559 = vmatprep.subr.bf16.mxu0 0
  %560 = vmatpush2.bf16.msra.mxu0 0
  %561 = vmatprep.subr.bf16.mxu0 0
  %562 = vmatpush2.bf16.msra.mxu0 0
  %563 = vmatprep.subr.bf16.mxu0 0
  %564 = vmatpush2.bf16.msra.mxu0 0
  %565 = vmatprep.subr.bf16.mxu0 0
  %566 = vmatpush2.bf16.msra.mxu0 0
  %567 = vmatprep.subr.bf16.mxu0 0
  %568 = vmatpush2.bf16.msra.mxu0 0
  %569 = vmatprep.mubr.bf16.mxu0 0
  %570 = vmatmul.mubr.bf16.gmra.mxu0 %v245
  %v571 = vpop.f32.mrf.mxu0
  %v572 = vadd.f32 0.0, %v571
  %v573 = vpop.f32.mrf.mxu0
  %v574 = vpop.f32.mrf.mxu0
  %v575 = vadd.f32 0.0, %v574
  %v576 = vpop.f32.mrf.mxu0
  %577 = vmatprep.mubr.bf16.mxu0 0
  %578 = vmatmul.mubr.bf16.gmra.mxu0 %v246
  %v579 = vpop.f32.mrf.mxu0
  %v580 = vadd.f32 0.0, %v579
  %v581 = vpop.f32.mrf.mxu0
  %v582 = vpop.f32.mrf.mxu0
  %v583 = vadd.f32 0.0, %v582
  %v584 = vpop.f32.mrf.mxu0
  %585 = vdwg.mxu0
  %v586 = vadd.f32 %v459, %v572
  %v587 = vadd.f32 %v462, %v575
  %v588 = vadd.f32 %v467, %v580
  %v589 = vadd.f32 %v470, %v583
  %v590 = vlaneseq
  %v591 = vshrl.u32 %v590, 7
  %v592 = vsub.s32 1, %v591
  %v593 = vrot.slane %v21, %v592
  %v594 = vmul.f32 %v586, %v593
  %v595 = vmul.f32 %v587, %v593
  %v596 = vmul.f32 %v588, %v593
  %v597 = vmul.f32 %v589, %v593
  %v598 = vlaneseq
  %v599 = vshrl.u32 %v598, 7
  %v600 = vsub.s32 2, %v599
  %v601 = vrot.slane %v21, %v600
  %v602 = vadd.f32 %v594, %v601
  %v603 = vadd.f32 %v595, %v601
  %v604 = vadd.f32 %v596, %v601
  %v605 = vadd.f32 %v597, %v601
  %v606 = vmax.f32 %v602, 0.0
  %v607 = vmax.f32 %v603, 0.0
  %v608 = vmax.f32 %v604, 0.0
  %v609 = vmax.f32 %v605, 0.0
  %v610 = vpack.c.bf16 %v607, %v606
  %v611 = vpack.c.bf16 %v609, %v608
  %v613 = vshrl.u32 %v610, 16
  %v615 = vrot.slane %v613, 7
  %v616 = vshll.u32 %v610, 16
  %v618 = vor.u32 %v615, %v616
  %v620 = vshrl.u32 %v611, 16
  %v622 = vrot.slane %v620, 7
  %v623 = vshll.u32 %v611, 16
  %v625 = vor.u32 %v622, %v623
  %v626 = vsel %vm211, %v615, %v625
  %v629 = vsel %vm230, 0, %v618
  %v630 = vrot.slane %v616, 1
  %v631 = vor.u32 %v613, %v630
  %v632 = vrot.slane %v623, 1
  %v633 = vsel %vm232, %v631, %v632
  %v634 = vor.u32 %v620, %v632
  %v637 = vsel %vm241, %v634, 0
  %v638 = vmul.bf16 %v629, %v195
  %v639 = vmul.bf16 %v626, %v196
  %v640 = vmul.bf16 %v633, %v209
  %v641 = vmul.bf16 %v637, %v210
  %v642 = vld [vmem:[%s3] sm:$0xf]
  %v643 = vld [vmem:[%s3 + $0x4] sm:$0xf]
  %v644 = vld [vmem:[%s3 + $0x8] sm:$0xf]
  %v645 = vld [vmem:[%s3 + $0xc] sm:$0xf]
  %v646 = vld [vmem:[%s3 + $0x10] sm:$0xf]
  %v647 = vld [vmem:[%s3 + $0x14] sm:$0xf]
  %v648 = vld [vmem:[%s3 + $0x18] sm:$0xf]
  %v649 = vld [vmem:[%s3 + $0x1c] sm:$0xf]
  %v650 = vld [vmem:[%s3 + $0x20] sm:$0xf]
  %v651 = vld [vmem:[%s3 + $0x24] sm:$0xf]
  %v652 = vld [vmem:[%s3 + $0x28] sm:$0xf]
  %v653 = vld [vmem:[%s3 + $0x2c] sm:$0xf]
  %v654 = vld [vmem:[%s3 + $0x30] sm:$0xf]
  %v655 = vld [vmem:[%s3 + $0x34] sm:$0xf]
  %v656 = vld [vmem:[%s3 + $0x38] sm:$0xf]
  %v657 = vld [vmem:[%s3 + $0x3c] sm:$0xf]
  %v658 = vld [vmem:[%s3 + $0x40] sm:$0xf]
  %v659 = vld [vmem:[%s3 + $0x44] sm:$0xf]
  %v660 = vld [vmem:[%s3 + $0x48] sm:$0xf]
  %v661 = vld [vmem:[%s3 + $0x4c] sm:$0xf]
  %v662 = vld [vmem:[%s3 + $0x50] sm:$0xf]
  %v663 = vld [vmem:[%s3 + $0x54] sm:$0xf]
  %v664 = vld [vmem:[%s3 + $0x58] sm:$0xf]
  %v665 = vld [vmem:[%s3 + $0x5c] sm:$0xf]
  %v666 = vld [vmem:[%s3 + $0x60] sm:$0xf]
  %v667 = vld [vmem:[%s3 + $0x64] sm:$0xf]
  %v668 = vld [vmem:[%s3 + $0x68] sm:$0xf]
  %v669 = vld [vmem:[%s3 + $0x6c] sm:$0xf]
  %v670 = vld [vmem:[%s3 + $0x70] sm:$0xf]
  %v671 = vld [vmem:[%s3 + $0x74] sm:$0xf]
  %v672 = vld [vmem:[%s3 + $0x78] sm:$0xf]
  %v673 = vld [vmem:[%s3 + $0x7c] sm:$0xf]
  %v690 = vunpack.c.l.b16 %v658
  %v691 = vunpack.c.l.b16 %v659
  %v692 = vunpack.c.l.b16 %v660
  %v693 = vunpack.c.l.b16 %v661
  %v694 = vunpack.c.l.b16 %v662
  %v695 = vunpack.c.l.b16 %v663
  %v696 = vunpack.c.l.b16 %v664
  %v697 = vunpack.c.l.b16 %v665
  %v698 = vunpack.c.l.b16 %v666
  %v699 = vunpack.c.l.b16 %v667
  %v700 = vunpack.c.l.b16 %v668
  %v701 = vunpack.c.l.b16 %v669
  %v702 = vunpack.c.l.b16 %v670
  %v703 = vunpack.c.l.b16 %v671
  %v704 = vunpack.c.l.b16 %v672
  %v705 = vunpack.c.l.b16 %v673
  %v706 = vpack.c.b16 %v691, %v690
  %v707 = vpack.c.b16 %v693, %v692
  %v708 = vpack.c.b16 %v695, %v694
  %v709 = vpack.c.b16 %v697, %v696
  %v710 = vpack.c.b16 %v699, %v698
  %v711 = vpack.c.b16 %v701, %v700
  %v712 = vpack.c.b16 %v703, %v702
  %v713 = vpack.c.b16 %v705, %v704
  %722 = vmatprep.subr.bf16.mxu0 0
  %723 = vmatpush1.bf16.msra.mxu0 %v713
  %724 = vmatprep.subr.bf16.mxu0 0
  %725 = vmatpush1.bf16.msra.mxu0 %v712
  %726 = vmatprep.subr.bf16.mxu0 0
  %727 = vmatpush1.bf16.msra.mxu0 %v711
  %728 = vmatprep.subr.bf16.mxu0 0
  %729 = vmatpush1.bf16.msra.mxu0 %v710
  %730 = vmatprep.subr.bf16.mxu0 0
  %731 = vmatpush1.bf16.msra.mxu0 %v709
  %732 = vmatprep.subr.bf16.mxu0 0
  %733 = vmatpush1.bf16.msra.mxu0 %v708
  %734 = vmatprep.subr.bf16.mxu0 0
  %735 = vmatpush1.bf16.msra.mxu0 %v707
  %736 = vmatprep.subr.bf16.mxu0 0
  %737 = vmatpush1.bf16.msra.mxu0 %v706
  %738 = vmatprep.subr.bf16.mxu0 0
  %739 = vmatpush2.bf16.msra.mxu0 0
  %740 = vmatprep.subr.bf16.mxu0 0
  %741 = vmatpush2.bf16.msra.mxu0 0
  %742 = vmatprep.subr.bf16.mxu0 0
  %743 = vmatpush2.bf16.msra.mxu0 0
  %744 = vmatprep.subr.bf16.mxu0 0
  %745 = vmatpush2.bf16.msra.mxu0 0
  %746 = vmatprep.subr.bf16.mxu0 0
  %747 = vmatpush2.bf16.msra.mxu0 0
  %748 = vmatprep.subr.bf16.mxu0 0
  %749 = vmatpush2.bf16.msra.mxu0 0
  %750 = vmatprep.subr.bf16.mxu0 0
  %751 = vmatpush2.bf16.msra.mxu0 0
  %752 = vmatprep.subr.bf16.mxu0 0
  %753 = vmatpush2.bf16.msra.mxu0 0
  %754 = vmatprep.mubr.bf16.mxu0 0
  %755 = vmatmul.mubr.bf16.gmra.mxu0 %v610
  %v756 = vpop.f32.mrf.mxu0
  %v757 = vadd.f32 0.0, %v756
  %v758 = vpop.f32.mrf.mxu0
  %v759 = vpop.f32.mrf.mxu0
  %v760 = vadd.f32 0.0, %v759
  %v761 = vpop.f32.mrf.mxu0
  %762 = vmatprep.mubr.bf16.mxu0 0
  %763 = vmatmul.mubr.bf16.gmra.mxu0 %v611
  %v764 = vpop.f32.mrf.mxu0
  %v765 = vadd.f32 0.0, %v764
  %v766 = vpop.f32.mrf.mxu0
  %v767 = vpop.f32.mrf.mxu0
  %v768 = vadd.f32 0.0, %v767
  %v769 = vpop.f32.mrf.mxu0
  %770 = vdwg.mxu0
  %v787 = vunpack.c.l.b16 %v642
  %v788 = vunpack.c.l.b16 %v643
  %v789 = vunpack.c.l.b16 %v644
  %v790 = vunpack.c.l.b16 %v645
  %v791 = vunpack.c.l.b16 %v646
  %v792 = vunpack.c.l.b16 %v647
  %v793 = vunpack.c.l.b16 %v648
  %v794 = vunpack.c.l.b16 %v649
  %v795 = vunpack.c.l.b16 %v650
  %v796 = vunpack.c.l.b16 %v651
  %v797 = vunpack.c.l.b16 %v652
  %v798 = vunpack.c.l.b16 %v653
  %v799 = vunpack.c.l.b16 %v654
  %v800 = vunpack.c.l.b16 %v655
  %v801 = vunpack.c.l.b16 %v656
  %v802 = vunpack.c.l.b16 %v657
  %v803 = vpack.c.b16 %v788, %v787
  %v804 = vpack.c.b16 %v790, %v789
  %v805 = vpack.c.b16 %v792, %v791
  %v806 = vpack.c.b16 %v794, %v793
  %v807 = vpack.c.b16 %v796, %v795
  %v808 = vpack.c.b16 %v798, %v797
  %v809 = vpack.c.b16 %v800, %v799
  %v810 = vpack.c.b16 %v802, %v801
  %819 = vmatprep.subr.bf16.mxu0 0
  %820 = vmatpush1.bf16.msra.mxu0 %v810
  %821 = vmatprep.subr.bf16.mxu0 0
  %822 = vmatpush1.bf16.msra.mxu0 %v809
  %823 = vmatprep.subr.bf16.mxu0 0
  %824 = vmatpush1.bf16.msra.mxu0 %v808
  %825 = vmatprep.subr.bf16.mxu0 0
  %826 = vmatpush1.bf16.msra.mxu0 %v807
  %827 = vmatprep.subr.bf16.mxu0 0
  %828 = vmatpush1.bf16.msra.mxu0 %v806
  %829 = vmatprep.subr.bf16.mxu0 0
  %830 = vmatpush1.bf16.msra.mxu0 %v805
  %831 = vmatprep.subr.bf16.mxu0 0
  %832 = vmatpush1.bf16.msra.mxu0 %v804
  %833 = vmatprep.subr.bf16.mxu0 0
  %834 = vmatpush1.bf16.msra.mxu0 %v803
  %835 = vmatprep.subr.bf16.mxu0 0
  %836 = vmatpush2.bf16.msra.mxu0 0
  %837 = vmatprep.subr.bf16.mxu0 0
  %838 = vmatpush2.bf16.msra.mxu0 0
  %839 = vmatprep.subr.bf16.mxu0 0
  %840 = vmatpush2.bf16.msra.mxu0 0
  %841 = vmatprep.subr.bf16.mxu0 0
  %842 = vmatpush2.bf16.msra.mxu0 0
  %843 = vmatprep.subr.bf16.mxu0 0
  %844 = vmatpush2.bf16.msra.mxu0 0
  %845 = vmatprep.subr.bf16.mxu0 0
  %846 = vmatpush2.bf16.msra.mxu0 0
  %847 = vmatprep.subr.bf16.mxu0 0
  %848 = vmatpush2.bf16.msra.mxu0 0
  %849 = vmatprep.subr.bf16.mxu0 0
  %850 = vmatpush2.bf16.msra.mxu0 0
  %851 = vmatprep.mubr.bf16.mxu0 0
  %852 = vmatmul.mubr.bf16.gmra.mxu0 %v638
  %v853 = vpop.f32.mrf.mxu0
  %v854 = vadd.f32 %v757, %v853
  %v855 = vpop.f32.mrf.mxu0
  %v856 = vpop.f32.mrf.mxu0
  %v857 = vadd.f32 %v760, %v856
  %v858 = vpop.f32.mrf.mxu0
  %859 = vmatprep.mubr.bf16.mxu0 0
  %860 = vmatmul.mubr.bf16.gmra.mxu0 %v639
  %v861 = vpop.f32.mrf.mxu0
  %v862 = vadd.f32 %v765, %v861
  %v863 = vpop.f32.mrf.mxu0
  %v864 = vpop.f32.mrf.mxu0
  %v865 = vadd.f32 %v768, %v864
  %v866 = vpop.f32.mrf.mxu0
  %867 = vdwg.mxu0
  %v868 = vld [vmem:[%s3 + $0x80] sm:$0xf]
  %v869 = vld [vmem:[%s3 + $0x84] sm:$0xf]
  %v870 = vld [vmem:[%s3 + $0x88] sm:$0xf]
  %v871 = vld [vmem:[%s3 + $0x8c] sm:$0xf]
  %v872 = vld [vmem:[%s3 + $0x90] sm:$0xf]
  %v873 = vld [vmem:[%s3 + $0x94] sm:$0xf]
  %v874 = vld [vmem:[%s3 + $0x98] sm:$0xf]
  %v875 = vld [vmem:[%s3 + $0x9c] sm:$0xf]
  %v876 = vld [vmem:[%s3 + $0xa0] sm:$0xf]
  %v877 = vld [vmem:[%s3 + $0xa4] sm:$0xf]
  %v878 = vld [vmem:[%s3 + $0xa8] sm:$0xf]
  %v879 = vld [vmem:[%s3 + $0xac] sm:$0xf]
  %v880 = vld [vmem:[%s3 + $0xb0] sm:$0xf]
  %v881 = vld [vmem:[%s3 + $0xb4] sm:$0xf]
  %v882 = vld [vmem:[%s3 + $0xb8] sm:$0xf]
  %v883 = vld [vmem:[%s3 + $0xbc] sm:$0xf]
  %v900 = vunpack.c.l.b16 %v868
  %v901 = vunpack.c.l.b16 %v869
  %v902 = vunpack.c.l.b16 %v870
  %v903 = vunpack.c.l.b16 %v871
  %v904 = vunpack.c.l.b16 %v872
  %v905 = vunpack.c.l.b16 %v873
  %v906 = vunpack.c.l.b16 %v874
  %v907 = vunpack.c.l.b16 %v875
  %v908 = vunpack.c.l.b16 %v876
  %v909 = vunpack.c.l.b16 %v877
  %v910 = vunpack.c.l.b16 %v878
  %v911 = vunpack.c.l.b16 %v879
  %v912 = vunpack.c.l.b16 %v880
  %v913 = vunpack.c.l.b16 %v881
  %v914 = vunpack.c.l.b16 %v882
  %v915 = vunpack.c.l.b16 %v883
  %v916 = vpack.c.b16 %v901, %v900
  %v917 = vpack.c.b16 %v903, %v902
  %v918 = vpack.c.b16 %v905, %v904
  %v919 = vpack.c.b16 %v907, %v906
  %v920 = vpack.c.b16 %v909, %v908
  %v921 = vpack.c.b16 %v911, %v910
  %v922 = vpack.c.b16 %v913, %v912
  %v923 = vpack.c.b16 %v915, %v914
  %932 = vmatprep.subr.bf16.mxu0 0
  %933 = vmatpush1.bf16.msra.mxu0 %v923
  %934 = vmatprep.subr.bf16.mxu0 0
  %935 = vmatpush1.bf16.msra.mxu0 %v922
  %936 = vmatprep.subr.bf16.mxu0 0
  %937 = vmatpush1.bf16.msra.mxu0 %v921
  %938 = vmatprep.subr.bf16.mxu0 0
  %939 = vmatpush1.bf16.msra.mxu0 %v920
  %940 = vmatprep.subr.bf16.mxu0 0
  %941 = vmatpush1.bf16.msra.mxu0 %v919
  %942 = vmatprep.subr.bf16.mxu0 0
  %943 = vmatpush1.bf16.msra.mxu0 %v918
  %944 = vmatprep.subr.bf16.mxu0 0
  %945 = vmatpush1.bf16.msra.mxu0 %v917
  %946 = vmatprep.subr.bf16.mxu0 0
  %947 = vmatpush1.bf16.msra.mxu0 %v916
  %948 = vmatprep.subr.bf16.mxu0 0
  %949 = vmatpush2.bf16.msra.mxu0 0
  %950 = vmatprep.subr.bf16.mxu0 0
  %951 = vmatpush2.bf16.msra.mxu0 0
  %952 = vmatprep.subr.bf16.mxu0 0
  %953 = vmatpush2.bf16.msra.mxu0 0
  %954 = vmatprep.subr.bf16.mxu0 0
  %955 = vmatpush2.bf16.msra.mxu0 0
  %956 = vmatprep.subr.bf16.mxu0 0
  %957 = vmatpush2.bf16.msra.mxu0 0
  %958 = vmatprep.subr.bf16.mxu0 0
  %959 = vmatpush2.bf16.msra.mxu0 0
  %960 = vmatprep.subr.bf16.mxu0 0
  %961 = vmatpush2.bf16.msra.mxu0 0
  %962 = vmatprep.subr.bf16.mxu0 0
  %963 = vmatpush2.bf16.msra.mxu0 0
  %964 = vmatprep.mubr.bf16.mxu0 0
  %965 = vmatmul.mubr.bf16.gmra.mxu0 %v640
  %v966 = vpop.f32.mrf.mxu0
  %v967 = vadd.f32 0.0, %v966
  %v968 = vpop.f32.mrf.mxu0
  %v969 = vpop.f32.mrf.mxu0
  %v970 = vadd.f32 0.0, %v969
  %v971 = vpop.f32.mrf.mxu0
  %972 = vmatprep.mubr.bf16.mxu0 0
  %973 = vmatmul.mubr.bf16.gmra.mxu0 %v641
  %v974 = vpop.f32.mrf.mxu0
  %v975 = vadd.f32 0.0, %v974
  %v976 = vpop.f32.mrf.mxu0
  %v977 = vpop.f32.mrf.mxu0
  %v978 = vadd.f32 0.0, %v977
  %v979 = vpop.f32.mrf.mxu0
  %980 = vdwg.mxu0
  %v981 = vadd.f32 %v854, %v967
  %v982 = vadd.f32 %v857, %v970
  %v983 = vadd.f32 %v862, %v975
  %v984 = vadd.f32 %v865, %v978
  %v985 = vlaneseq
  %v986 = vshrl.u32 %v985, 7
  %v987 = vsub.s32 3, %v986
  %v988 = vrot.slane %v21, %v987
  %v989 = vmul.f32 %v981, %v988
  %v990 = vmul.f32 %v982, %v988
  %v991 = vmul.f32 %v983, %v988
  %v992 = vmul.f32 %v984, %v988
  %v993 = vlaneseq
  %v994 = vshrl.u32 %v993, 7
  %v995 = vsub.s32 4, %v994
  %v996 = vrot.slane %v21, %v995
  %v997 = vadd.f32 %v989, %v996
  %v998 = vadd.f32 %v990, %v996
  %v999 = vadd.f32 %v991, %v996
  %v1000 = vadd.f32 %v992, %v996
  %v1001 = vmax.f32 %v997, 0.0
  %v1002 = vmax.f32 %v998, 0.0
  %v1003 = vmax.f32 %v999, 0.0
  %v1004 = vmax.f32 %v1000, 0.0
  %v1005 = vadd.f32 %v1001, %v114
  %v1006 = vadd.f32 %v1002, %v117
  %v1007 = vadd.f32 %v1003, %v122
  %v1008 = vadd.f32 %v1004, %v125
  %1009 = vst [vmem:[%s5] sm:$0xff] %v1005
  %1010 = vst [vmem:[%s5 + $0x8] sm:$0xff] %v1006
  %1011 = vst [vmem:[%s5 + $0x10] sm:$0xff] %v1007
  %1012 = vst [vmem:[%s5 + $0x18] sm:$0xff] %v1008
  // Predicated region
  $region22: #{_forward.1} parent=0 // pred_check
    _
  $region23: #{_forward.1} parent=0 // pred_check_branch
    %1014 = sbr.rel (0) target = $region25
  $region24: #{_forward.1} parent=0 // pred_region
    _
  $region25: #{_forward.1} parent=0 // pred_fallthru
    _
  // Predicated region
  $region26: #{_forward.1} parent=0 // pred_check
    _
  $region27: #{_forward.1} parent=0 // pred_check_branch
    %1016 = sbr.rel (0) target = $region29
  $region28: #{_forward.1} parent=0 // pred_region
    _
  $region29: #{_forward.1} parent=0 // pred_fallthru
    _

</llo_original>
